<compile_context>
chip_gen: v7x
topology: tpu7x:2x2x1
jax: 0.10.0
libtpu: 0.0.40
codegen_flags: <defaults>
</compile_context>

<pallas_src>
import functools

import jax
import jax.numpy as jnp
from jax.experimental import pallas as pl
from jax.experimental.pallas import tpu as pltpu


def _yolo_decode_kernel(gxy_ref, aw_ref, ah_ref, x_ref, o_ref, *,
                        scale_x_y, inv_w, inv_h):
    """Decode one (R_TILE, n_ch, HW_TILE) planar block.

    gxy_ref : VMEM (2, HW_TILE) f32   row 0 = grid_x, row 1 = grid_y
    aw_ref  : VMEM (R_TILE, 1, 1) f32 anchor_w / W per (b, a) row
    ah_ref  : VMEM (R_TILE, 1, 1) f32 anchor_h / H per (b, a) row
    x_ref   : VMEM (R_TILE, n_ch, HW_TILE) raw head output (any float dtype)
    o_ref   : VMEM (R_TILE, n_ch, HW_TILE) f32 decoded output (planar)
    """
    f32 = jnp.float32
    sig = jax.nn.sigmoid
    off = 0.5 * (scale_x_y - 1.0)

    gx = gxy_ref[0:1, :]            # (1, HW_TILE) -> broadcasts over rows
    gy = gxy_ref[1:2, :]
    aw = aw_ref[...]                # (R_TILE, 1, 1)
    ah = ah_ref[...]

    tx = x_ref[:, 0:1, :].astype(f32)     # (R_TILE, 1, HW_TILE)
    ty = x_ref[:, 1:2, :].astype(f32)
    tw = x_ref[:, 2:3, :].astype(f32)
    th = x_ref[:, 3:4, :].astype(f32)

    # Direct slice stores: no concatenate, no extra full-block VMEM temp.
    o_ref[:, 0:1, :] = (sig(tx) + gx) * inv_w
    o_ref[:, 1:2, :] = (sig(ty) + gy) * inv_h
    o_ref[:, 2:3, :] = (jnp.exp(tw) * scale_x_y - off) * aw
    o_ref[:, 3:4, :] = (jnp.exp(th) * scale_x_y - off) * ah
    # detection + class confidences in one fused sigmoid pass
    o_ref[:, 4:, :] = sig(x_ref[:, 4:, :].astype(f32))


def _pick_hw_tile(hw, max_lanes=2048):
    """Largest lane-dense tile: multiple of 128 dividing HW, else full HW."""
    if hw % 128 != 0 or hw <= max_lanes:
        return hw
    best = 128
    t = 128
    while t <= max_lanes:
        if hw % t == 0:
            best = t
        t += 128
    return best


def _pick_row_tile(n_rows, bytes_per_row_block, max_bytes=4 << 20):
    """Largest divisor of n_rows fitting the VMEM budget; prefer >=2 blocks
    along the row axis so v7x's two TensorCores both get work."""
    divs = [d for d in range(1, n_rows + 1) if n_rows % d == 0]
    fitting = [d for d in divs if d * bytes_per_row_block <= max_bytes] or [1]
    cand = [d for d in fitting if n_rows // d >= 2]
    return max(cand) if cand else max(fitting)


def yolo_layer_forward(x, *, anchor_mask, num_classes, anchors, num_anchors,
                       stride=32, scale_x_y=1.0):
    """Equivalent of YoloLayer.forward (eval mode) for NCHW input x."""
    anchor_step = len(anchors) // num_anchors
    masked = []
    for m in anchor_mask:
        masked += anchors[m * anchor_step:(m + 1) * anchor_step]
    masked = [a / stride for a in masked]

    A = len(anchor_mask)
    n_ch = 5 + num_classes
    B, C, H, W = x.shape
    assert C == A * n_ch, f"channel mismatch: {C} != {A}*{n_ch}"
    HW = H * W
    R = B * A

    # Free reshape: (B, A*n_ch, H, W) -> (B*A, n_ch, H*W). Keep input dtype
    # (bf16 heads stay bf16 on the HBM read; kernel upcasts in-register).
    x3 = x.reshape(R, n_ch, HW)

    # Tiny auxiliary inputs.
    gx = jnp.tile(jnp.arange(W, dtype=jnp.float32), H)      # gx[h*W+w] = w
    gy = jnp.repeat(jnp.arange(H, dtype=jnp.float32), W)    # gy[h*W+w] = h
    gxy = jnp.stack([gx, gy], axis=0)                        # (2, HW)

    aw_a = jnp.asarray(masked[0::2], dtype=jnp.float32)      # (A,)
    ah_a = jnp.asarray(masked[1::2], dtype=jnp.float32)
    aw_rows = jnp.tile(aw_a / W, B).reshape(R, 1, 1)          # row = b*A + a
    ah_rows = jnp.tile(ah_a / H, B).reshape(R, 1, 1)

    # Tiling.
    hw_tile = _pick_hw_tile(HW)
    per_row_block_bytes = n_ch * hw_tile * 4                  # f32 output side
    r_tile = _pick_row_tile(R, per_row_block_bytes)
    grid = (R // r_tile, HW // hw_tile)

    out = pl.pallas_call(
        functools.partial(_yolo_decode_kernel,
                          scale_x_y=float(scale_x_y),
                          inv_w=1.0 / W, inv_h=1.0 / H),
        grid=grid,
        in_specs=[
            pl.BlockSpec((2, hw_tile), lambda r, t: (0, t)),
            pl.BlockSpec((r_tile, 1, 1), lambda r, t: (r, 0, 0)),
            pl.BlockSpec((r_tile, 1, 1), lambda r, t: (r, 0, 0)),
            pl.BlockSpec((r_tile, n_ch, hw_tile), lambda r, t: (r, 0, t)),
        ],
        out_specs=pl.BlockSpec((r_tile, n_ch, hw_tile),
                               lambda r, t: (r, 0, t)),
        out_shape=jax.ShapeDtypeStruct((R, n_ch, HW), jnp.float32),
        compiler_params=pltpu.CompilerParams(
            dimension_semantics=("parallel", "parallel"),
            vmem_limit_bytes=32 * 1024 * 1024),
    )(gxy, aw_rows, ah_rows, x3)

    # Glue: (B*A, n_ch, HW) -> (B*A, HW, n_ch) -> (B, A*H*W, n_ch).
    out = jnp.swapaxes(out, 1, 2).reshape(B, A * HW, n_ch)
    return out


def _yolo_decode_ref(x, num_classes, masked_anchors, A, scale_x_y):
    """Pure-JAX reference mirroring the PyTorch yolo_decode."""
    B, C, H, W = x.shape
    n_ch = 5 + num_classes
    o = x.astype(jnp.float32).reshape(B, A, n_ch, H, W).transpose(0, 1, 3, 4, 2)
    bx = jax.nn.sigmoid(o[..., 0])
    by = jax.nn.sigmoid(o[..., 1])
    bw = jnp.exp(o[..., 2]) * scale_x_y - 0.5 * (scale_x_y - 1)
    bh = jnp.exp(o[..., 3]) * scale_x_y - 0.5 * (scale_x_y - 1)
    det = jax.nn.sigmoid(o[..., 4])
    cls = jax.nn.sigmoid(o[..., 5:])
    gx = jnp.arange(W, dtype=jnp.float32)[None, None, None, :]
    gy = jnp.arange(H, dtype=jnp.float32)[None, None, :, None]
    bx = bx + gx
    by = by + gy
    aw = jnp.asarray(masked_anchors[0::2], jnp.float32)[None, :, None, None]
    ah = jnp.asarray(masked_anchors[1::2], jnp.float32)[None, :, None, None]
    bw = bw * aw
    bh = bh * ah
    boxes = jnp.stack([bx / W, by / H, bw / W, bh / H],
                      axis=-1).reshape(B, A * H * W, 4)
    det = det.reshape(B, A * H * W, 1)
    cls = cls.reshape(B, A * H * W, num_classes)
    return jnp.concatenate([boxes, det, cls], axis=-1)


if __name__ == "__main__":
    key = jax.random.PRNGKey(0)

    # Small, self-consistent config (A must be 3 and H == W, matching the
    # hard-coded grid repeat in the original torch code).
    B, num_classes, H, W = 2, 4, 16, 16
    anchor_mask = [0, 1, 2]
    num_anchors = 9
    anchors = [12, 16, 19, 36, 40, 28, 36, 75, 76, 55,
               72, 146, 142, 110, 192, 243, 459, 401]
    stride = 8
    scale_x_y = 1.05

    A = len(anchor_mask)
    n_ch = 5 + num_classes
    x = jax.random.normal(key, (B, A * n_ch, H, W), dtype=jnp.float32)

    out = yolo_layer_forward(
        x, anchor_mask=anchor_mask, num_classes=num_classes, anchors=anchors,
        num_anchors=num_anchors, stride=stride, scale_x_y=scale_x_y)
    out = jax.block_until_ready(out)

    # Verify against the pure-JAX reference of the torch semantics.
    anchor_step = len(anchors) // num_anchors
    masked = []
    for m in anchor_mask:
        masked += anchors[m * anchor_step:(m + 1) * anchor_step]
    masked = [a / stride for a in masked]
    ref = _yolo_decode_ref(x, num_classes, masked, A, scale_x_y)

    assert out.shape == (B, A * H * W, n_ch), out.shape
    assert jnp.allclose(out, ref, atol=1e-5, rtol=1e-5), "mismatch vs reference"
    print("KERNEL_OK")
</pallas_src>

<mosaic_0001>
module attributes {stable_mosaic.version = 11 : i64} {
  func.func @_yolo_decode_kernel(%arg0: i32, %arg1: i32, %arg2: memref<2x256xf32, #tpu.memory_space<vmem>>, %arg3: memref<3x1x1xf32, #tpu.memory_space<vmem>>, %arg4: memref<3x1x1xf32, #tpu.memory_space<vmem>>, %arg5: memref<3x9x256xf32, #tpu.memory_space<vmem>>, %arg6: memref<3x9x256xf32, #tpu.memory_space<vmem>>) attributes {dimension_semantics = [#tpu.dimension_semantics<parallel>, #tpu.dimension_semantics<parallel>], iteration_bounds = array<i64: 2, 1>, scalar_prefetch = 0 : i64, scratch_operands = 0 : i64, tpu.core_type = #tpu.core_type<tc>, window_params = [{transform_indices = @transform_0, window_bounds = array<i64: 2, 256>}, {transform_indices = @transform_1, window_bounds = array<i64: 3, 1, 1>}, {transform_indices = @transform_2, window_bounds = array<i64: 3, 1, 1>}, {transform_indices = @transform_3, window_bounds = array<i64: 3, 9, 256>}, {transform_indices = @transform_4, window_bounds = array<i64: 3, 9, 256>}]} {
    %c0 = arith.constant 0 : index
    %c0_0 = arith.constant 0 : index
    %0 = vector.load %arg2[%c0, %c0_0] : memref<2x256xf32, #tpu.memory_space<vmem>>, vector<1x256xf32>
    %c1 = arith.constant 1 : index
    %c0_1 = arith.constant 0 : index
    %1 = vector.load %arg2[%c1, %c0_1] : memref<2x256xf32, #tpu.memory_space<vmem>>, vector<1x256xf32>
    %c0_2 = arith.constant 0 : index
    %c0_3 = arith.constant 0 : index
    %c0_4 = arith.constant 0 : index
    %2 = vector.load %arg3[%c0_2, %c0_3, %c0_4] : memref<3x1x1xf32, #tpu.memory_space<vmem>>, vector<3x1x1xf32>
    %c0_5 = arith.constant 0 : index
    %c0_6 = arith.constant 0 : index
    %c0_7 = arith.constant 0 : index
    %3 = vector.load %arg4[%c0_5, %c0_6, %c0_7] : memref<3x1x1xf32, #tpu.memory_space<vmem>>, vector<3x1x1xf32>
    %c0_8 = arith.constant 0 : index
    %c0_9 = arith.constant 0 : index
    %c0_10 = arith.constant 0 : index
    %4 = vector.load %arg5[%c0_8, %c0_9, %c0_10] : memref<3x9x256xf32, #tpu.memory_space<vmem>>, vector<3x1x256xf32>
    %c0_11 = arith.constant 0 : index
    %c1_12 = arith.constant 1 : index
    %c0_13 = arith.constant 0 : index
    %5 = vector.load %arg5[%c0_11, %c1_12, %c0_13] : memref<3x9x256xf32, #tpu.memory_space<vmem>>, vector<3x1x256xf32>
    %c0_14 = arith.constant 0 : index
    %c2 = arith.constant 2 : index
    %c0_15 = arith.constant 0 : index
    %6 = vector.load %arg5[%c0_14, %c2, %c0_15] : memref<3x9x256xf32, #tpu.memory_space<vmem>>, vector<3x1x256xf32>
    %c0_16 = arith.constant 0 : index
    %c3 = arith.constant 3 : index
    %c0_17 = arith.constant 0 : index
    %7 = vector.load %arg5[%c0_16, %c3, %c0_17] : memref<3x9x256xf32, #tpu.memory_space<vmem>>, vector<3x1x256xf32>
    %8 = arith.negf %4 : vector<3x1x256xf32>
    %9 = math.exp %8 : vector<3x1x256xf32>
    %cst = arith.constant 1.000000e+00 : f32
    %10 = vector.broadcast %cst : f32 to vector<3x1x256xf32>
    %11 = arith.addf %10, %9 : vector<3x1x256xf32>
    %12 = arith.divf %10, %11 : vector<3x1x256xf32>
    %13 = vector.shape_cast %0 : vector<1x256xf32> to vector<1x1x256xf32>
    %14 = vector.broadcast %13 : vector<1x1x256xf32> to vector<3x1x256xf32>
    %15 = arith.addf %12, %14 : vector<3x1x256xf32>
    %cst_18 = arith.constant 6.250000e-02 : f32
    %16 = vector.broadcast %cst_18 : f32 to vector<3x1x256xf32>
    %17 = arith.mulf %15, %16 : vector<3x1x256xf32>
    %c0_19 = arith.constant 0 : index
    %c0_20 = arith.constant 0 : index
    %c0_21 = arith.constant 0 : index
    %18 = vector.load %arg6[%c0_19, %c0_20, %c0_21] : memref<3x9x256xf32, #tpu.memory_space<vmem>>, vector<3x1x256xf32>
    tpu.vector_store %arg6[%c0_19, %c0_20, %c0_21], %17 {strides = array<i32>} : memref<3x9x256xf32, #tpu.memory_space<vmem>>, vector<3x1x256xf32>,
    %19 = arith.negf %5 : vector<3x1x256xf32>
    %20 = math.exp %19 : vector<3x1x256xf32>
    %cst_22 = arith.constant 1.000000e+00 : f32
    %21 = vector.broadcast %cst_22 : f32 to vector<3x1x256xf32>
    %22 = arith.addf %21, %20 : vector<3x1x256xf32>
    %23 = arith.divf %21, %22 : vector<3x1x256xf32>
    %24 = vector.shape_cast %1 : vector<1x256xf32> to vector<1x1x256xf32>
    %25 = vector.broadcast %24 : vector<1x1x256xf32> to vector<3x1x256xf32>
    %26 = arith.addf %23, %25 : vector<3x1x256xf32>
    %cst_23 = arith.constant 6.250000e-02 : f32
    %27 = vector.broadcast %cst_23 : f32 to vector<3x1x256xf32>
    %28 = arith.mulf %26, %27 : vector<3x1x256xf32>
    %c0_24 = arith.constant 0 : index
    %c1_25 = arith.constant 1 : index
    %c0_26 = arith.constant 0 : index
    %29 = vector.load %arg6[%c0_24, %c1_25, %c0_26] : memref<3x9x256xf32, #tpu.memory_space<vmem>>, vector<3x1x256xf32>
    tpu.vector_store %arg6[%c0_24, %c1_25, %c0_26], %28 {strides = array<i32>} : memref<3x9x256xf32, #tpu.memory_space<vmem>>, vector<3x1x256xf32>,
    %30 = math.exp %6 : vector<3x1x256xf32>
    %cst_27 = arith.constant 1.050000e+00 : f32
    %31 = vector.broadcast %cst_27 : f32 to vector<3x1x256xf32>
    %32 = arith.mulf %30, %31 : vector<3x1x256xf32>
    %cst_28 = arith.constant 2.500000e-02 : f32
    %33 = vector.broadcast %cst_28 : f32 to vector<3x1x256xf32>
    %34 = arith.subf %32, %33 : vector<3x1x256xf32>
    %35 = vector.broadcast %2 : vector<3x1x1xf32> to vector<3x1x256xf32>
    %36 = arith.mulf %34, %35 : vector<3x1x256xf32>
    %c0_29 = arith.constant 0 : index
    %c2_30 = arith.constant 2 : index
    %c0_31 = arith.constant 0 : index
    %37 = vector.load %arg6[%c0_29, %c2_30, %c0_31] : memref<3x9x256xf32, #tpu.memory_space<vmem>>, vector<3x1x256xf32>
    tpu.vector_store %arg6[%c0_29, %c2_30, %c0_31], %36 {strides = array<i32>} : memref<3x9x256xf32, #tpu.memory_space<vmem>>, vector<3x1x256xf32>,
    %38 = math.exp %7 : vector<3x1x256xf32>
    %cst_32 = arith.constant 1.050000e+00 : f32
    %39 = vector.broadcast %cst_32 : f32 to vector<3x1x256xf32>
    %40 = arith.mulf %38, %39 : vector<3x1x256xf32>
    %cst_33 = arith.constant 2.500000e-02 : f32
    %41 = vector.broadcast %cst_33 : f32 to vector<3x1x256xf32>
    %42 = arith.subf %40, %41 : vector<3x1x256xf32>
    %43 = vector.broadcast %3 : vector<3x1x1xf32> to vector<3x1x256xf32>
    %44 = arith.mulf %42, %43 : vector<3x1x256xf32>
    %c0_34 = arith.constant 0 : index
    %c3_35 = arith.constant 3 : index
    %c0_36 = arith.constant 0 : index
    %45 = vector.load %arg6[%c0_34, %c3_35, %c0_36] : memref<3x9x256xf32, #tpu.memory_space<vmem>>, vector<3x1x256xf32>
    tpu.vector_store %arg6[%c0_34, %c3_35, %c0_36], %44 {strides = array<i32>} : memref<3x9x256xf32, #tpu.memory_space<vmem>>, vector<3x1x256xf32>,
    %c0_37 = arith.constant 0 : index
    %c4 = arith.constant 4 : index
    %c0_38 = arith.constant 0 : index
    %46 = vector.load %arg5[%c0_37, %c4, %c0_38] : memref<3x9x256xf32, #tpu.memory_space<vmem>>, vector<3x5x256xf32>
    %47 = arith.negf %46 : vector<3x5x256xf32>
    %48 = math.exp %47 : vector<3x5x256xf32>
    %cst_39 = arith.constant 1.000000e+00 : f32
    %49 = vector.broadcast %cst_39 : f32 to vector<3x5x256xf32>
    %50 = arith.addf %49, %48 : vector<3x5x256xf32>
    %51 = arith.divf %49, %50 : vector<3x5x256xf32>
    %c0_40 = arith.constant 0 : index
    %c4_41 = arith.constant 4 : index
    %c0_42 = arith.constant 0 : index
    %52 = vector.load %arg6[%c0_40, %c4_41, %c0_42] : memref<3x9x256xf32, #tpu.memory_space<vmem>>, vector<3x5x256xf32>
    tpu.vector_store %arg6[%c0_40, %c4_41, %c0_42], %51 {strides = array<i32>} : memref<3x9x256xf32, #tpu.memory_space<vmem>>, vector<3x5x256xf32>,
    return
  }
  func.func @transform_0(%arg0: i32, %arg1: i32) -> (i32, i32) {
    %c0_i32 = arith.constant 0 : i32
    %c0_i32_0 = arith.constant 0 : i32
    return %c0_i32, %arg1 : i32, i32
  }
  func.func @transform_1(%arg0: i32, %arg1: i32) -> (i32, i32, i32) {
    %c0_i32 = arith.constant 0 : i32
    %c0_i32_0 = arith.constant 0 : i32
    %c0_i32_1 = arith.constant 0 : i32
    return %arg0, %c0_i32, %c0_i32_0 : i32, i32, i32
  }
  func.func @transform_2(%arg0: i32, %arg1: i32) -> (i32, i32, i32) {
    %c0_i32 = arith.constant 0 : i32
    %c0_i32_0 = arith.constant 0 : i32
    %c0_i32_1 = arith.constant 0 : i32
    return %arg0, %c0_i32, %c0_i32_0 : i32, i32, i32
  }
  func.func @transform_3(%arg0: i32, %arg1: i32) -> (i32, i32, i32) {
    %c0_i32 = arith.constant 0 : i32
    %c0_i32_0 = arith.constant 0 : i32
    return %arg0, %c0_i32, %arg1 : i32, i32, i32
  }
  func.func @transform_4(%arg0: i32, %arg1: i32) -> (i32, i32, i32) {
    %c0_i32 = arith.constant 0 : i32
    %c0_i32_0 = arith.constant 0 : i32
    return %arg0, %c0_i32, %arg1 : i32, i32, i32
  }
}

</mosaic_0001>

<llo_original>
// kernel: tpu_custom_call.1
$region0: #{tpu_custom_call.1}
  #allocation0 [shape = 'u32[]', space=smem, size = 0x4, offset = 0x4, fixed_abs, tag = 'smem constant byte address 0x4 - core index']
  #allocation1 [shape = 'u32[144,128]{1,0:T(1,128)}', space=vmem, size = 0x12000, scoped, tag = 'internal scratch']
  %s0 = inlined_call_operand.vmem [shape: f32[2,256], index: 0, kind: input, shape index: {}]
  %s1 = inlined_call_operand.vmem [shape: f32[6,1,1], index: 1, kind: input, shape index: {}]
  %s2 = inlined_call_operand.vmem [shape: f32[6,1,1], index: 2, kind: input, shape index: {}]
  %s3 = inlined_call_operand.vmem [shape: f32[6,9,256], index: 3, kind: input, shape index: {}]
  %s4 = inlined_call_operand.vmem [shape: f32[6,9,256], index: 4, kind: output, shape index: {}]
  %s5 = sld [smem:[#allocation0]]
  $region49: #{tpu_custom_call.1} parent=0
    _
  %s7 = ssub.s32 1, %s5
  %s8 = scalar_select 0, %s7, %s5
  loop: start=0, step=1, limit=4
  $region2: #{tpu_custom_call.1} parent=0 // loop_pre_header
    _
  $region3: #{tpu_custom_call.1} parent=0 // loop_header
    %s10 = sphi 0, %s14
    %p11 = scmp.ge.s32.totalorder %s10, 4
    %s17 = sphi 0, %s29
    %s18 = sphi 0, %s25
    %s19 = sphi 0, %s17
    %s20 = sphi 0, %s18
    %s21 = sphi 0, %s19
    %s22 = sphi 0, %s20
    %s32 = sphi 0, %s34
    %s35 = sphi 0, %s32
    %s36 = sphi 0, %s35
    %s52 = sphi 0, %s36
    %s58 = sphi 0, %s60
    %s61 = sphi 0, %s58
    %s62 = sphi 0, %s61
    %s78 = sphi 0, %s62
    %s84 = sphi 0, %s86
    %s87 = sphi 0, %s84
    %s88 = sphi 0, %s87
    %s104 = sphi 0, %s88
    %s112 = sphi 0, %s114
    %s115 = sphi 0, %s112
    %s116 = sphi 0, %s115
    %s132 = sphi 0, %s116
    %s140 = sphi 0, %s142
    %s143 = sphi 0, %s140
    %s144 = sphi 0, %s143
    %s160 = sphi 0, %s144
  $region4: #{tpu_custom_call.1} parent=0 // loop_header_branch
    %13 = sbr.rel (%p11) target = $region8
  $region5: #{tpu_custom_call.1} parent=0 // loop_body
    %s15 = ssub.s32 %s10, 1
    %s16 = ssub.s32 %s10, 2
    %s23 = sadd.s32 1, %s18
    %p24 = scmp.ge.s32.totalorder %s23, 1
    %s25 = scalar_select %p24, 0, %s23
    %s26 = sadd.s32 1, %s17
    %s27 = scalar_select %p24, %s26, %s17
    %p28 = scmp.ge.s32.totalorder %s27, 2
    %s29 = scalar_select %p28, 0, %s27
    %s30 = ssub.s32 %s18, %s25
    %p31 = scmp.eq.s32.totalorder %s30, 0
    %s33 = sadd.s32 %s32, 1
    %s34 = scalar_select %p31, %s32, %s33
    %p37 = pneg %p31
    %p38 = scmp.eq.s32.totalorder %s10, 1
    %p39 = por %p37, %p38
    %p40 = scmp.ne.s32.totalorder %s32, %s35
    %p41 = scmp.eq.s32.totalorder %s10, 0
    %p42 = por %p40, %p41
    %p43 = scmp.ne.s32.totalorder %s32, %s35
    %p44 = scmp.eq.s32.totalorder %s15, 1
    %p45 = por %p43, %p44
    %p46 = scmp.ne.s32.totalorder %s35, %s36
    %p47 = scmp.eq.s32.totalorder %s15, 0
    %p48 = por %p46, %p47
    %p49 = scmp.ne.s32.totalorder %s35, %s36
    %p50 = scmp.eq.s32.totalorder %s16, 1
    %p51 = por %p49, %p50
    %p53 = scmp.ne.s32.totalorder %s36, %s52
    %p54 = scmp.eq.s32.totalorder %s16, 0
    %p55 = por %p53, %p54
    %s56 = ssub.s32 %s17, %s29
    %p57 = scmp.eq.s32.totalorder %s56, 0
    %s59 = sadd.s32 %s58, 1
    %s60 = scalar_select %p57, %s58, %s59
    %p63 = pneg %p57
    %p64 = scmp.eq.s32.totalorder %s10, 1
    %p65 = por %p63, %p64
    %p66 = scmp.ne.s32.totalorder %s58, %s61
    %p67 = scmp.eq.s32.totalorder %s10, 0
    %p68 = por %p66, %p67
    %p69 = scmp.ne.s32.totalorder %s58, %s61
    %p70 = scmp.eq.s32.totalorder %s15, 1
    %p71 = por %p69, %p70
    %p72 = scmp.ne.s32.totalorder %s61, %s62
    %p73 = scmp.eq.s32.totalorder %s15, 0
    %p74 = por %p72, %p73
    %p75 = scmp.ne.s32.totalorder %s61, %s62
    %p76 = scmp.eq.s32.totalorder %s16, 1
    %p77 = por %p75, %p76
    %p79 = scmp.ne.s32.totalorder %s62, %s78
    %p80 = scmp.eq.s32.totalorder %s16, 0
    %p81 = por %p79, %p80
    %s82 = ssub.s32 %s17, %s29
    %p83 = scmp.eq.s32.totalorder %s82, 0
    %s85 = sadd.s32 %s84, 1
    %s86 = scalar_select %p83, %s84, %s85
    %p89 = pneg %p83
    %p90 = scmp.eq.s32.totalorder %s10, 1
    %p91 = por %p89, %p90
    %p92 = scmp.ne.s32.totalorder %s84, %s87
    %p93 = scmp.eq.s32.totalorder %s10, 0
    %p94 = por %p92, %p93
    %p95 = scmp.ne.s32.totalorder %s84, %s87
    %p96 = scmp.eq.s32.totalorder %s15, 1
    %p97 = por %p95, %p96
    %p98 = scmp.ne.s32.totalorder %s87, %s88
    %p99 = scmp.eq.s32.totalorder %s15, 0
    %p100 = por %p98, %p99
    %p101 = scmp.ne.s32.totalorder %s87, %s88
    %p102 = scmp.eq.s32.totalorder %s16, 1
    %p103 = por %p101, %p102
    %p105 = scmp.ne.s32.totalorder %s88, %s104
    %p106 = scmp.eq.s32.totalorder %s16, 0
    %p107 = por %p105, %p106
    %s108 = ssub.s32 %s17, %s29
    %s109 = ssub.s32 %s18, %s25
    %s110 = sor.u32 %s108, %s109
    %p111 = scmp.eq.s32.totalorder %s110, 0
    %s113 = sadd.s32 %s112, 1
    %s114 = scalar_select %p111, %s112, %s113
    %p117 = pneg %p111
    %p118 = scmp.eq.s32.totalorder %s10, 1
    %p119 = por %p117, %p118
    %p120 = scmp.ne.s32.totalorder %s112, %s115
    %p121 = scmp.eq.s32.totalorder %s10, 0
    %p122 = por %p120, %p121
    %p123 = scmp.ne.s32.totalorder %s112, %s115
    %p124 = scmp.eq.s32.totalorder %s15, 1
    %p125 = por %p123, %p124
    %p126 = scmp.ne.s32.totalorder %s115, %s116
    %p127 = scmp.eq.s32.totalorder %s15, 0
    %p128 = por %p126, %p127
    %p129 = scmp.ne.s32.totalorder %s115, %s116
    %p130 = scmp.eq.s32.totalorder %s16, 1
    %p131 = por %p129, %p130
    %p133 = scmp.ne.s32.totalorder %s116, %s132
    %p134 = scmp.eq.s32.totalorder %s16, 0
    %p135 = por %p133, %p134
    %s136 = ssub.s32 %s17, %s29
    %s137 = ssub.s32 %s18, %s25
    %s138 = sor.u32 %s136, %s137
    %p139 = scmp.eq.s32.totalorder %s138, 0
    %s141 = sadd.s32 %s140, 1
    %s142 = scalar_select %p139, %s140, %s141
    %p145 = pneg %p139
    %p146 = scmp.eq.s32.totalorder %s10, 1
    %p147 = por %p145, %p146
    %p148 = scmp.ne.s32.totalorder %s140, %s143
    %p149 = scmp.eq.s32.totalorder %s10, 0
    %p150 = por %p148, %p149
    %p151 = scmp.ne.s32.totalorder %s140, %s143
    %p152 = scmp.eq.s32.totalorder %s15, 1
    %p153 = por %p151, %p152
    %p154 = scmp.ne.s32.totalorder %s143, %s144
    %p155 = scmp.eq.s32.totalorder %s15, 0
    %p156 = por %p154, %p155
    %p157 = scmp.ne.s32.totalorder %s143, %s144
    %p158 = scmp.eq.s32.totalorder %s16, 1
    %p159 = por %p157, %p158
    %p161 = scmp.ne.s32.totalorder %s144, %s160
    %p162 = scmp.eq.s32.totalorder %s16, 0
    %p163 = por %p161, %p162
    %p164 = scmp.le.s32.totalorder 1, %s10
    %p165 = scmp.lt.s32.totalorder %s10, 3
    %p166 = pnand %p164, %p165
    %p167 = pneg %p166
    // Predicated region
    $region9: #{tpu_custom_call.1} parent=5 // pred_check
      _
    $region10: #{tpu_custom_call.1} parent=5 // pred_check_branch
      %169 = sbr.rel (%p166) target = $region12
    $region11: #{tpu_custom_call.1} parent=5 // pred_region
      %s170 = ssub.s32 %s10, 1
      // Predicated region
      $region13: #{tpu_custom_call.1} parent=11 // pred_check
        %p171 = pneg %p48
      $region14: #{tpu_custom_call.1} parent=11 // pred_check_branch
        %173 = sbr.rel (%p171) target = $region16
      $region15: #{tpu_custom_call.1} parent=11 // pred_region
        %s174 = smul.u32 2, %s20
        %p175 = scmp.lt.s32.totalorder %s174, 1
        %s176 = scalar_select %p175, %s174, 1
        %s177 = smul.addr %s176, 2
        %s178 = scalar_lea.vmem %s0, %s177
        %s179 = smul.u32 2, %s20
      $region16: #{tpu_custom_call.1} parent=11 // pred_fallthru
        _
    $region12: #{tpu_custom_call.1} parent=5 // pred_fallthru
      _
    %p180 = scmp.lt.s32.totalorder %s10, 2
    // Predicated region
    $region17: #{tpu_custom_call.1} parent=5 // pred_check
      %p181 = pneg %p180
    $region18: #{tpu_custom_call.1} parent=5 // pred_check_branch
      %183 = sbr.rel (%p181) target = $region20
    $region19: #{tpu_custom_call.1} parent=5 // pred_region
      // Predicated region
      $region21: #{tpu_custom_call.1} parent=19 // pred_check
        %p184 = pneg %p68
      $region22: #{tpu_custom_call.1} parent=19 // pred_check_branch
        %186 = sbr.rel (%p184) target = $region24
      $region23: #{tpu_custom_call.1} parent=19 // pred_region
        %s187 = smul.u32 3, %s17
        %p188 = scmp.lt.s32.totalorder %s187, 5
        %s189 = scalar_select %p188, %s187, 5
        %s190 = scalar_lea.vmem %s1, %s189
        %s191 = smul.u32 3, %s17
      $region24: #{tpu_custom_call.1} parent=19 // pred_fallthru
        _
      // Predicated region
      $region25: #{tpu_custom_call.1} parent=19 // pred_check
        %p192 = pneg %p94
      $region26: #{tpu_custom_call.1} parent=19 // pred_check_branch
        %194 = sbr.rel (%p192) target = $region28
      $region27: #{tpu_custom_call.1} parent=19 // pred_region
        %s195 = smul.u32 3, %s17
        %p196 = scmp.lt.s32.totalorder %s195, 5
        %s197 = scalar_select %p196, %s195, 5
        %s198 = scalar_lea.vmem %s2, %s197
        %s199 = smul.u32 3, %s17
      $region28: #{tpu_custom_call.1} parent=19 // pred_fallthru
        _
      // Predicated region
      $region29: #{tpu_custom_call.1} parent=19 // pred_check
        %p200 = pneg %p122
      $region30: #{tpu_custom_call.1} parent=19 // pred_check_branch
        %202 = sbr.rel (%p200) target = $region32
      $region31: #{tpu_custom_call.1} parent=19 // pred_region
        %s203 = smul.u32 3, %s17
        %s204 = smul.u32 2, %s18
        %p205 = scmp.lt.s32.totalorder %s203, 5
        %s206 = scalar_select %p205, %s203, 5
        %p207 = scmp.lt.s32.totalorder %s204, 1
        %s208 = scalar_select %p207, %s204, 1
        %s209 = smul.addr %s206, 4
        %s210 = sadd.s32 %s208, %s209
        %s211 = smul.addr %s210, 8
        %s212 = scalar_lea.vmem %s3, %s211
        %s213 = smul.u32 3, %s17
        %s214 = smul.u32 2, %s18
      $region32: #{tpu_custom_call.1} parent=19 // pred_fallthru
        _
    $region20: #{tpu_custom_call.1} parent=5 // pred_fallthru
      _
    %p215 = scmp.le.s32.totalorder 1, %s10
    %p216 = scmp.lt.s32.totalorder %s10, 3
    %p217 = pnand %p215, %p216
    %p218 = pneg %p217
    // Predicated region
    $region33: #{tpu_custom_call.1} parent=5 // pred_check
      _
    $region34: #{tpu_custom_call.1} parent=5 // pred_check_branch
      %220 = sbr.rel (%p217) target = $region36
    $region35: #{tpu_custom_call.1} parent=5 // pred_region
      %s221 = ssub.s32 %s10, 1
      %s222 = smul.u32 2, %s20
      %p223 = scmp.lt.s32.totalorder %s222, 1
      %s224 = scalar_select %p223, %s222, 1
      %s225 = smul.addr %s224, 2
      %s226 = scalar_lea.vmem %s0, %s225
      %p227 = pneg %p48
      %p228 = pneg %p45
      %s229 = smul.u32 3, %s19
      %p230 = scmp.lt.s32.totalorder %s229, 5
      %s231 = scalar_select %p230, %s229, 5
      %s232 = scalar_lea.vmem %s1, %s231
      %p233 = pneg %p74
      %p234 = pneg %p71
      %s235 = smul.u32 3, %s19
      %p236 = scmp.lt.s32.totalorder %s235, 5
      %s237 = scalar_select %p236, %s235, 5
      %s238 = scalar_lea.vmem %s2, %s237
      %p239 = pneg %p100
      %p240 = pneg %p97
      %s241 = smul.u32 3, %s19
      %s242 = smul.u32 2, %s20
      %p243 = scmp.lt.s32.totalorder %s241, 5
      %s244 = scalar_select %p243, %s241, 5
      %p245 = scmp.lt.s32.totalorder %s242, 1
      %s246 = scalar_select %p245, %s242, 1
      %s247 = smul.addr %s244, 4
      %s248 = sadd.s32 %s246, %s247
      %s249 = smul.addr %s248, 8
      %s250 = scalar_lea.vmem %s3, %s249
      %p251 = pneg %p128
      %p252 = pneg %p125
      %p253 = pneg %p156
      %p254 = pneg %p153
      %s255 = smul.u32 3, %s19
      %s256 = smul.u32 2, %s20
      %p257 = scmp.lt.s32.totalorder %s255, 5
      %s258 = scalar_select %p257, %s255, 5
      %p259 = scmp.lt.s32.totalorder %s256, 1
      %s260 = scalar_select %p259, %s256, 1
      %s261 = smul.addr %s258, 4
      %s262 = sadd.s32 %s260, %s261
      %s263 = smul.addr %s262, 8
      %s264 = scalar_lea.vmem %s4, %s263
      %s265 = smul.u32 2, %s20
      %p266 = scmp.lt.s32.totalorder %s265, 1
      %s267 = scalar_select %p266, %s265, 1
      %s268 = smul.addr %s267, 2
      %s269 = scalar_lea.vmem %s0, %s268
      %s270 = smul.u32 2, %s20
      %s271 = smul.u32 3, %s19
      %p272 = scmp.lt.s32.totalorder %s271, 5
      %s273 = scalar_select %p272, %s271, 5
      %s274 = scalar_lea.vmem %s1, %s273
      %s275 = smul.u32 3, %s19
      %s276 = smul.u32 3, %s19
      %p277 = scmp.lt.s32.totalorder %s276, 5
      %s278 = scalar_select %p277, %s276, 5
      %s279 = scalar_lea.vmem %s2, %s278
      %s280 = smul.u32 3, %s19
      %s281 = smul.u32 3, %s19
      %s282 = smul.u32 2, %s20
      %p283 = scmp.lt.s32.totalorder %s281, 5
      %s284 = scalar_select %p283, %s281, 5
      %p285 = scmp.lt.s32.totalorder %s282, 1
      %s286 = scalar_select %p285, %s282, 1
      %s287 = smul.addr %s284, 4
      %s288 = sadd.s32 %s286, %s287
      %s289 = smul.addr %s288, 8
      %s290 = scalar_lea.vmem %s3, %s289
      %s291 = smul.u32 3, %s19
      %s292 = smul.u32 2, %s20
      %s293 = smul.u32 3, %s19
      %s294 = smul.u32 2, %s20
      %p295 = scmp.lt.s32.totalorder %s293, 5
      %s296 = scalar_select %p295, %s293, 5
      %p297 = scmp.lt.s32.totalorder %s294, 1
      %s298 = scalar_select %p297, %s294, 1
      %s299 = smul.addr %s296, 4
      %s300 = sadd.s32 %s298, %s299
      %s301 = smul.addr %s300, 8
      %s302 = scalar_lea.vmem %s4, %s301
      %s303 = smul.u32 3, %s19
      %s304 = smul.u32 2, %s20
      %v305 = vld [vmem:[%s269] ss:$2 sm:$0x3]
      %s306 = scalar_lea.vmem %s269, 1
      %v307 = vld [vmem:[%s306] ss:$2 sm:$0x3]
      %v308 = vld [vmem:[%s274] sm:$0x1]
      %v309 = vld [vmem:[%s274 + $0x1] sm:$0x1]
      %v310 = vld [vmem:[%s274 + $0x2] sm:$0x1]
      %v311 = vld [vmem:[%s279] sm:$0x1]
      %v312 = vld [vmem:[%s279 + $0x1] sm:$0x1]
      %v313 = vld [vmem:[%s279 + $0x2] sm:$0x1]
      %v314 = vld [vmem:[%s290] ss:$8 sm:$0x3]
      %s315 = scalar_lea.vmem %s290, 32
      %v316 = vld [vmem:[%s315] ss:$8 sm:$0x3]
      %s317 = scalar_lea.vmem %s290, 64
      %v318 = vld [vmem:[%s317] ss:$8 sm:$0x3]
      %s319 = scalar_lea.vmem %s290, 1
      %v320 = vld [vmem:[%s319] ss:$8 sm:$0x3]
      %s321 = scalar_lea.vmem %s290, 33
      %v322 = vld [vmem:[%s321] ss:$8 sm:$0x3]
      %s323 = scalar_lea.vmem %s290, 65
      %v324 = vld [vmem:[%s323] ss:$8 sm:$0x3]
      %s325 = scalar_lea.vmem %s290, 2
      %v326 = vld [vmem:[%s325] ss:$8 sm:$0x3]
      %s327 = scalar_lea.vmem %s290, 34
      %v328 = vld [vmem:[%s327] ss:$8 sm:$0x3]
      %s329 = scalar_lea.vmem %s290, 66
      %v330 = vld [vmem:[%s329] ss:$8 sm:$0x3]
      %s331 = scalar_lea.vmem %s290, 3
      %v332 = vld [vmem:[%s331] ss:$8 sm:$0x3]
      %s333 = scalar_lea.vmem %s290, 35
      %v334 = vld [vmem:[%s333] ss:$8 sm:$0x3]
      %s335 = scalar_lea.vmem %s290, 67
      %v336 = vld [vmem:[%s335] ss:$8 sm:$0x3]
      %v337 = vxor.u32 %v314, 2147483648
      %v338 = vxor.u32 %v316, 2147483648
      %v339 = vxor.u32 %v318, 2147483648
      %v340 = vmul.f32 %v337, 1.442695
      %v341 = vpow.pop %v340
      %v342 = vmul.f32 %v338, 1.442695
      %v343 = vpow.pop %v342
      %v344 = vmul.f32 %v339, 1.442695
      %v345 = vpow.pop %v344
      %v346 = vadd.f32 %v341, 1.0
      %v347 = vadd.f32 %v343, 1.0
      %v348 = vadd.f32 %v345, 1.0
      %v349 = vrcp.pop %v346
      %v350 = vmul.f32 1.0, %v349
      %v351 = vrcp.pop %v347
      %v352 = vmul.f32 1.0, %v351
      %v353 = vrcp.pop %v348
      %v354 = vmul.f32 1.0, %v353
      %v355 = vadd.f32 %v350, %v305
      %v356 = vadd.f32 %v352, %v305
      %v357 = vadd.f32 %v354, %v305
      %v358 = vmul.f32 %v355, 0.0625
      %v359 = vmul.f32 %v356, 0.0625
      %v360 = vmul.f32 %v357, 0.0625
      %v361 = vlaneseq
      %vm362 = vcmp.ge.s32.totalorder %v361, 0
      %vm363 = vcmp.lt.s32.totalorder %v361, 256
      %vm364 = vmand %vm362, %vm363
      %365 = vst.msk [vmem:[%s302] ss:$8 sm:$0x3] %vm364, %v358
      %366 = vst.msk [vmem:[%s302] ss:$8 sm:$0x0] %vm364, %v358
      %s367 = scalar_lea.vmem %s302, 32
      %368 = vst.msk [vmem:[%s367] ss:$8 sm:$0x3] %vm364, %v359
      %369 = vst.msk [vmem:[%s367] ss:$8 sm:$0x0] %vm364, %v359
      %s370 = scalar_lea.vmem %s302, 64
      %371 = vst.msk [vmem:[%s370] ss:$8 sm:$0x3] %vm364, %v360
      %372 = vst.msk [vmem:[%s370] ss:$8 sm:$0x0] %vm364, %v360
      %v373 = vxor.u32 %v320, 2147483648
      %v374 = vxor.u32 %v322, 2147483648
      %v375 = vxor.u32 %v324, 2147483648
      %v376 = vmul.f32 %v373, 1.442695
      %v377 = vpow.pop %v376
      %v378 = vmul.f32 %v374, 1.442695
      %v379 = vpow.pop %v378
      %v380 = vmul.f32 %v375, 1.442695
      %v381 = vpow.pop %v380
      %v382 = vadd.f32 %v377, 1.0
      %v383 = vadd.f32 %v379, 1.0
      %v384 = vadd.f32 %v381, 1.0
      %v385 = vrcp.pop %v382
      %v386 = vmul.f32 1.0, %v385
      %v387 = vrcp.pop %v383
      %v388 = vmul.f32 1.0, %v387
      %v389 = vrcp.pop %v384
      %v390 = vmul.f32 1.0, %v389
      %v391 = vadd.f32 %v386, %v307
      %v392 = vadd.f32 %v388, %v307
      %v393 = vadd.f32 %v390, %v307
      %v394 = vmul.f32 %v391, 0.0625
      %v395 = vmul.f32 %v392, 0.0625
      %v396 = vmul.f32 %v393, 0.0625
      %s397 = scalar_lea.vmem %s302, 1
      %398 = vst.msk [vmem:[%s397] ss:$8 sm:$0x3] %vm364, %v394
      %399 = vst.msk [vmem:[%s397] ss:$8 sm:$0x0] %vm364, %v394
      %s400 = scalar_lea.vmem %s302, 33
      %401 = vst.msk [vmem:[%s400] ss:$8 sm:$0x3] %vm364, %v395
      %402 = vst.msk [vmem:[%s400] ss:$8 sm:$0x0] %vm364, %v395
      %s403 = scalar_lea.vmem %s302, 65
      %404 = vst.msk [vmem:[%s403] ss:$8 sm:$0x3] %vm364, %v396
      %405 = vst.msk [vmem:[%s403] ss:$8 sm:$0x0] %vm364, %v396
      %v406 = vmul.f32 %v326, 1.442695
      %v407 = vpow.pop %v406
      %v408 = vmul.f32 %v328, 1.442695
      %v409 = vpow.pop %v408
      %v410 = vmul.f32 %v330, 1.442695
      %v411 = vpow.pop %v410
      %v412 = vmul.f32 %v407, 1.05
      %v413 = vmul.f32 %v409, 1.05
      %v414 = vmul.f32 %v411, 1.05
      %v415 = vsub.f32 %v412, 0.025
      %v416 = vsub.f32 %v413, 0.025
      %v417 = vsub.f32 %v414, 0.025
      %419 = vset.pattern.permute.xlu0 0
      %420 = vperm.xlu0 %419, %v308
      %v421 = vpop.permute.xlu0 %420
      %v423 = vlaneseq
      %v424 = vshrl.u32 %v423, 7
      %v425 = vsub.s32 0, %v424
      %v426 = vrot.slane %v421, %v425
      %428 = vset.pattern.permute.xlu0 0
      %429 = vperm.xlu0 %428, %v309
      %v430 = vpop.permute.xlu0 %429
      %v432 = vlaneseq
      %v433 = vshrl.u32 %v432, 7
      %v434 = vsub.s32 0, %v433
      %v435 = vrot.slane %v430, %v434
      %437 = vset.pattern.permute.xlu0 0
      %438 = vperm.xlu0 %437, %v310
      %v439 = vpop.permute.xlu0 %438
      %v441 = vlaneseq
      %v442 = vshrl.u32 %v441, 7
      %v443 = vsub.s32 0, %v442
      %v444 = vrot.slane %v439, %v443
      %v445 = vmul.f32 %v415, %v426
      %v446 = vmul.f32 %v416, %v435
      %v447 = vmul.f32 %v417, %v444
      %s448 = scalar_lea.vmem %s302, 2
      %449 = vst.msk [vmem:[%s448] ss:$8 sm:$0x3] %vm364, %v445
      %450 = vst.msk [vmem:[%s448] ss:$8 sm:$0x0] %vm364, %v445
      %s451 = scalar_lea.vmem %s302, 34
      %452 = vst.msk [vmem:[%s451] ss:$8 sm:$0x3] %vm364, %v446
      %453 = vst.msk [vmem:[%s451] ss:$8 sm:$0x0] %vm364, %v446
      %s454 = scalar_lea.vmem %s302, 66
      %455 = vst.msk [vmem:[%s454] ss:$8 sm:$0x3] %vm364, %v447
      %456 = vst.msk [vmem:[%s454] ss:$8 sm:$0x0] %vm364, %v447
      %v457 = vmul.f32 %v332, 1.442695
      %v458 = vpow.pop %v457
      %v459 = vmul.f32 %v334, 1.442695
      %v460 = vpow.pop %v459
      %v461 = vmul.f32 %v336, 1.442695
      %v462 = vpow.pop %v461
      %v463 = vmul.f32 %v458, 1.05
      %v464 = vmul.f32 %v460, 1.05
      %v465 = vmul.f32 %v462, 1.05
      %v466 = vsub.f32 %v463, 0.025
      %v467 = vsub.f32 %v464, 0.025
      %v468 = vsub.f32 %v465, 0.025
      %470 = vset.pattern.permute.xlu0 0
      %471 = vperm.xlu0 %470, %v311
      %v472 = vpop.permute.xlu0 %471
      %v474 = vlaneseq
      %v475 = vshrl.u32 %v474, 7
      %v476 = vsub.s32 0, %v475
      %v477 = vrot.slane %v472, %v476
      %479 = vset.pattern.permute.xlu0 0
      %480 = vperm.xlu0 %479, %v312
      %v481 = vpop.permute.xlu0 %480
      %v483 = vlaneseq
      %v484 = vshrl.u32 %v483, 7
      %v485 = vsub.s32 0, %v484
      %v486 = vrot.slane %v481, %v485
      %488 = vset.pattern.permute.xlu0 0
      %489 = vperm.xlu0 %488, %v313
      %v490 = vpop.permute.xlu0 %489
      %v492 = vlaneseq
      %v493 = vshrl.u32 %v492, 7
      %v494 = vsub.s32 0, %v493
      %v495 = vrot.slane %v490, %v494
      %v496 = vmul.f32 %v466, %v477
      %v497 = vmul.f32 %v467, %v486
      %v498 = vmul.f32 %v468, %v495
      %s499 = scalar_lea.vmem %s302, 3
      %500 = vst.msk [vmem:[%s499] ss:$8 sm:$0x3] %vm364, %v496
      %501 = vst.msk [vmem:[%s499] ss:$8 sm:$0x0] %vm364, %v496
      %s502 = scalar_lea.vmem %s302, 35
      %503 = vst.msk [vmem:[%s502] ss:$8 sm:$0x3] %vm364, %v497
      %504 = vst.msk [vmem:[%s502] ss:$8 sm:$0x0] %vm364, %v497
      %s505 = scalar_lea.vmem %s302, 67
      %506 = vst.msk [vmem:[%s505] ss:$8 sm:$0x3] %vm364, %v498
      %507 = vst.msk [vmem:[%s505] ss:$8 sm:$0x0] %vm364, %v498
      %v508 = vld [vmem:[%s290] sm:$0xf0]
      %v509 = vld [vmem:[%s290 + $0x8] sm:$0xf0]
      %v510 = vld [vmem:[%s290 + $0x10] sm:$0x1]
      %v511 = vld [vmem:[%s290 + $0x18] sm:$0x1]
      %v512 = vld [vmem:[%s290 + $0x20] sm:$0xf0]
      %v513 = vld [vmem:[%s290 + $0x28] sm:$0xf0]
      %v514 = vld [vmem:[%s290 + $0x30] sm:$0x1]
      %v515 = vld [vmem:[%s290 + $0x38] sm:$0x1]
      %v516 = vld [vmem:[%s290 + $0x40] sm:$0xf0]
      %v517 = vld [vmem:[%s290 + $0x48] sm:$0xf0]
      %v518 = vld [vmem:[%s290 + $0x50] sm:$0x1]
      %v519 = vld [vmem:[%s290 + $0x58] sm:$0x1]
      %v520 = vxor.u32 %v508, 2147483648
      %v521 = vxor.u32 %v509, 2147483648
      %v522 = vxor.u32 %v510, 2147483648
      %v523 = vxor.u32 %v511, 2147483648
      %v524 = vxor.u32 %v512, 2147483648
      %v525 = vxor.u32 %v513, 2147483648
      %v526 = vxor.u32 %v514, 2147483648
      %v527 = vxor.u32 %v515, 2147483648
      %v528 = vxor.u32 %v516, 2147483648
      %v529 = vxor.u32 %v517, 2147483648
      %v530 = vxor.u32 %v518, 2147483648
      %v531 = vxor.u32 %v519, 2147483648
      %v532 = vmul.f32 %v520, 1.442695
      %v533 = vpow.pop %v532
      %v534 = vmul.f32 %v521, 1.442695
      %v535 = vpow.pop %v534
      %v536 = vmul.f32 %v522, 1.442695
      %v537 = vpow.pop %v536
      %v538 = vmul.f32 %v523, 1.442695
      %v539 = vpow.pop %v538
      %v540 = vmul.f32 %v524, 1.442695
      %v541 = vpow.pop %v540
      %v542 = vmul.f32 %v525, 1.442695
      %v543 = vpow.pop %v542
      %v544 = vmul.f32 %v526, 1.442695
      %v545 = vpow.pop %v544
      %v546 = vmul.f32 %v527, 1.442695
      %v547 = vpow.pop %v546
      %v548 = vmul.f32 %v528, 1.442695
      %v549 = vpow.pop %v548
      %v550 = vmul.f32 %v529, 1.442695
      %v551 = vpow.pop %v550
      %v552 = vmul.f32 %v530, 1.442695
      %v553 = vpow.pop %v552
      %v554 = vmul.f32 %v531, 1.442695
      %v555 = vpow.pop %v554
      %v556 = vadd.f32 %v533, 1.0
      %v557 = vadd.f32 %v535, 1.0
      %v558 = vadd.f32 %v537, 1.0
      %v559 = vadd.f32 %v539, 1.0
      %v560 = vadd.f32 %v541, 1.0
      %v561 = vadd.f32 %v543, 1.0
      %v562 = vadd.f32 %v545, 1.0
      %v563 = vadd.f32 %v547, 1.0
      %v564 = vadd.f32 %v549, 1.0
      %v565 = vadd.f32 %v551, 1.0
      %v566 = vadd.f32 %v553, 1.0
      %v567 = vadd.f32 %v555, 1.0
      %v568 = vrcp.pop %v556
      %v569 = vmul.f32 1.0, %v568
      %v570 = vrcp.pop %v557
      %v571 = vmul.f32 1.0, %v570
      %v572 = vrcp.pop %v558
      %v573 = vmul.f32 1.0, %v572
      %v574 = vrcp.pop %v559
      %v575 = vmul.f32 1.0, %v574
      %v576 = vrcp.pop %v560
      %v577 = vmul.f32 1.0, %v576
      %v578 = vrcp.pop %v561
      %v579 = vmul.f32 1.0, %v578
      %v580 = vrcp.pop %v562
      %v581 = vmul.f32 1.0, %v580
      %v582 = vrcp.pop %v563
      %v583 = vmul.f32 1.0, %v582
      %v584 = vrcp.pop %v564
      %v585 = vmul.f32 1.0, %v584
      %v586 = vrcp.pop %v565
      %v587 = vmul.f32 1.0, %v586
      %v588 = vrcp.pop %v566
      %v589 = vmul.f32 1.0, %v588
      %v590 = vrcp.pop %v567
      %v591 = vmul.f32 1.0, %v590
      %592 = vst [vmem:[%s302] sm:$0xf0] %v569
      %593 = vst [vmem:[%s302 + $0x8] sm:$0xf0] %v571
      %594 = vst [vmem:[%s302 + $0x10] sm:$0x1] %v573
      %595 = vst [vmem:[%s302 + $0x18] sm:$0x1] %v575
      %596 = vst [vmem:[%s302 + $0x20] sm:$0xf0] %v577
      %597 = vst [vmem:[%s302 + $0x28] sm:$0xf0] %v579
      %598 = vst [vmem:[%s302 + $0x30] sm:$0x1] %v581
      %599 = vst [vmem:[%s302 + $0x38] sm:$0x1] %v583
      %600 = vst [vmem:[%s302 + $0x40] sm:$0xf0] %v585
      %601 = vst [vmem:[%s302 + $0x48] sm:$0xf0] %v587
      %602 = vst [vmem:[%s302 + $0x50] sm:$0x1] %v589
      %603 = vst [vmem:[%s302 + $0x58] sm:$0x1] %v591
      %s604 = smul.u32 3, %s19
      %s605 = smul.u32 2, %s20
      %p606 = scmp.lt.s32.totalorder %s604, 5
      %s607 = scalar_select %p606, %s604, 5
      %p608 = scmp.lt.s32.totalorder %s605, 1
      %s609 = scalar_select %p608, %s605, 1
      %s610 = smul.addr %s607, 4
      %s611 = sadd.s32 %s609, %s610
      %s612 = smul.addr %s611, 8
      %s613 = scalar_lea.vmem %s4, %s612
      // Predicated region
      $region37: #{tpu_custom_call.1} parent=35 // pred_check
        %p614 = pneg %p153
      $region38: #{tpu_custom_call.1} parent=35 // pred_check_branch
        %616 = sbr.rel (%p614) target = $region40
      $region39: #{tpu_custom_call.1} parent=35 // pred_region
        %s617 = smul.u32 3, %s19
        %s618 = smul.u32 2, %s20
      $region40: #{tpu_custom_call.1} parent=35 // pred_fallthru
        _
    $region36: #{tpu_custom_call.1} parent=5 // pred_fallthru
      _
    %p619 = scmp.le.s32.totalorder 2, %s10
    // Predicated region
    $region41: #{tpu_custom_call.1} parent=5 // pred_check
      %p620 = pneg %p619
    $region42: #{tpu_custom_call.1} parent=5 // pred_check_branch
      %622 = sbr.rel (%p620) target = $region44
    $region43: #{tpu_custom_call.1} parent=5 // pred_region
      %s623 = ssub.s32 %s10, 2
      // Predicated region
      $region45: #{tpu_custom_call.1} parent=43 // pred_check
        %p624 = pneg %p159
      $region46: #{tpu_custom_call.1} parent=43 // pred_check_branch
        %626 = sbr.rel (%p624) target = $region48
      $region47: #{tpu_custom_call.1} parent=43 // pred_region
        %s627 = smul.u32 3, %s21
        %s628 = smul.u32 2, %s22
        %p629 = scmp.lt.s32.totalorder %s627, 5
        %s630 = scalar_select %p629, %s627, 5
        %p631 = scmp.lt.s32.totalorder %s628, 1
        %s632 = scalar_select %p631, %s628, 1
        %s633 = smul.addr %s630, 4
        %s634 = sadd.s32 %s632, %s633
        %s635 = smul.addr %s634, 8
        %s636 = scalar_lea.vmem %s4, %s635
      $region48: #{tpu_custom_call.1} parent=43 // pred_fallthru
        _
    $region44: #{tpu_custom_call.1} parent=5 // pred_fallthru
      _
  $region6: #{tpu_custom_call.1} parent=0 // loop_footer
    %s14 = sadd.s32 1, %s10
  $region7: #{tpu_custom_call.1} parent=0 // loop_footer_branch
    %9 = sbr.rel target = $region3
  $region8: #{tpu_custom_call.1} parent=0 // loop_exit
    _

</llo_original>
